<compile_context>
chip_gen: v7x
topology: tpu7x:2x2x1
jax: 0.10.0
libtpu: 0.0.40
codegen_flags: <defaults>
</compile_context>

<pallas_src>
import functools
import math

import jax
import jax.numpy as jnp
from jax import lax
from jax.experimental import pallas as pl
from jax.experimental.pallas import tpu as pltpu


# ---------------------------------------------------------------------------
# Kernel 1: fused Q/K/V projection (full-width GEMMs, resident weights).
# ---------------------------------------------------------------------------
def qkv_proj_kernel(q_ref, k_ref, v_ref, wq_ref, wk_ref, wv_ref,
                    qp_ref, kp_ref, vp_ref):
    qp_ref[0] = jnp.dot(q_ref[0], wq_ref[...],
                        preferred_element_type=jnp.float32).astype(qp_ref.dtype)
    kp_ref[0] = jnp.dot(k_ref[0], wk_ref[...],
                        preferred_element_type=jnp.float32).astype(kp_ref.dtype)
    vp_ref[0] = jnp.dot(v_ref[0], wv_ref[...],
                        preferred_element_type=jnp.float32).astype(vp_ref.dtype)


# ---------------------------------------------------------------------------
# Kernel 2: flash attention over pre-projected Q/K/V + fused output projection.
# ---------------------------------------------------------------------------
def flash_mha_kernel(qp_ref, kp_ref, vp_ref, wo_ref, o_ref,
                     m_sc, l_sc, acc_sc, *, num_heads: int, d_k: int):
    kv = pl.program_id(2)
    nkv = pl.num_programs(2)

    # Reset online-softmax state at the start of each (b, q_tile) kv sweep.
    @pl.when(kv == 0)
    def _():
        m_sc[...] = jnp.full_like(m_sc, -jnp.inf)
        l_sc[...] = jnp.zeros_like(l_sc)
        acc_sc[...] = jnp.zeros_like(acc_sc)

    qp = qp_ref[0]          # (tq,  D)  activation dtype, already scaled by 1/sqrt(d_k)
    kp = kp_ref[0]          # (tkv, D)
    vp = vp_ref[0]          # (tkv, D)

    # Static head loop: K/V tiles are loaded once per grid step regardless of H.
    # TODO(synk): for d_k < 128 on v6e/v7x the per-head q@k^T / p@v matmuls
    # underfill the 256-wide MXU; head-batching would widen N if that binds.
    for h in range(num_heads):
        lo = h * d_k
        q_h = qp[:, lo:lo + d_k]        # (tq,  d_k)
        k_h = kp[:, lo:lo + d_k]        # (tkv, d_k)
        v_h = vp[:, lo:lo + d_k]        # (tkv, d_k)

        # q @ k^T without an explicit transpose: contract last axes on the MXU.
        s = lax.dot_general(q_h, k_h, (((1,), (1,)), ((), ())),
                            preferred_element_type=jnp.float32)    # (tq, tkv)

        m_prev = m_sc[h]                                           # (tq, 1)
        m_new = jnp.maximum(m_prev, jnp.max(s, axis=-1, keepdims=True))
        alpha = jnp.exp(m_prev - m_new)
        # TODO(synk): on v6e/v7x with bf16 activations, computing p in bf16
        # roughly doubles EUP throughput; kept f32 here (f32 path, v5e-safe).
        p = jnp.exp(s - m_new)
        l_sc[h] = alpha * l_sc[h] + jnp.sum(p, axis=-1, keepdims=True)
        acc_sc[h] = alpha * acc_sc[h] + jnp.dot(
            p.astype(v_h.dtype), v_h, preferred_element_type=jnp.float32)
        m_sc[h] = m_new

    # End of the kv sweep: normalize each head and fold the output projection
    # (concat-over-heads + out-proj == sum over per-head row blocks of Wo^T).
    @pl.when(kv == nkv - 1)
    def _():
        tq, d_model = o_ref.shape[1], o_ref.shape[2]
        out = jnp.zeros((tq, d_model), jnp.float32)
        for h in range(num_heads):
            l = l_sc[h]
            inv_l = pl.reciprocal(l, approx=True)       # EUP slot
            inv_l = inv_l * (2.0 - l * inv_l)           # one Newton step -> ~f32 exact
            ctx = (acc_sc[h] * inv_l).astype(wo_ref.dtype)          # (tq, d_v)
            out = out + jnp.dot(ctx, wo_ref[h],
                                preferred_element_type=jnp.float32)  # (tq, D)
        o_ref[0] = out.astype(o_ref.dtype)


# ---------------------------------------------------------------------------
# Wrapper.
# ---------------------------------------------------------------------------
def multi_head_attention(q, k, v, wq, wk, wv, wo, num_heads,
                         *, seq_tile=None, tq=None, tkv=None):
    """q, k, v: [B, S, D]; wq/wk/wv/wo: PyTorch-layout [out, in] weights (bias-free)."""
    B, S, D = q.shape
    assert D % num_heads == 0
    d_k = D // num_heads
    d_v = d_k
    sm_scale = 1.0 / math.sqrt(float(d_k))

    # Sequence tiles: full S for small sequences, 256-multiples otherwise.
    # TODO(synk): keep 128 on v5e (smaller MXU / HBM BW); 256-512 on v6e/v7x.
    if seq_tile is None:
        seq_tile = S if S <= 256 else 256
    if tq is None:
        tq = S if S <= 256 else 256
    if tkv is None:
        tkv = S if S <= 256 else 256
    assert S % seq_tile == 0 and S % tq == 0 and S % tkv == 0

    # PyTorch Linear stores [out, in]; the kernels consume x @ W^T.
    wq_t = wq.T * jnp.asarray(sm_scale, dtype=wq.dtype)   # fold softmax scale into Wq
    wk_t = wk.T
    wv_t = wv.T
    # Per-head row blocks of Wo^T for the fused output projection.
    wo_heads = wo.T.reshape(num_heads, d_v, D)             # (H, d_v, D)

    # ---- pass 1: projections -------------------------------------------------
    qp, kp, vp = pl.pallas_call(
        qkv_proj_kernel,
        out_shape=(
            jax.ShapeDtypeStruct((B, S, D), q.dtype),
            jax.ShapeDtypeStruct((B, S, D), k.dtype),
            jax.ShapeDtypeStruct((B, S, D), v.dtype),
        ),
        grid_spec=pltpu.PrefetchScalarGridSpec(
            num_scalar_prefetch=0,
            grid=(B, S // seq_tile),
            in_specs=[
                pl.BlockSpec((1, seq_tile, D), lambda b, si: (b, si, 0)),
                pl.BlockSpec((1, seq_tile, D), lambda b, si: (b, si, 0)),
                pl.BlockSpec((1, seq_tile, D), lambda b, si: (b, si, 0)),
                pl.BlockSpec((D, D), lambda b, si: (0, 0)),   # resident Wq^T
                pl.BlockSpec((D, D), lambda b, si: (0, 0)),   # resident Wk^T
                pl.BlockSpec((D, D), lambda b, si: (0, 0)),   # resident Wv^T
            ],
            out_specs=[
                pl.BlockSpec((1, seq_tile, D), lambda b, si: (b, si, 0)),
                pl.BlockSpec((1, seq_tile, D), lambda b, si: (b, si, 0)),
                pl.BlockSpec((1, seq_tile, D), lambda b, si: (b, si, 0)),
            ],
        ),
        compiler_params=pltpu.CompilerParams(
            dimension_semantics=("parallel", "parallel")),
    )(q, k, v, wq_t, wk_t, wv_t)

    # ---- pass 2: flash attention + output projection --------------------------
    kernel = functools.partial(flash_mha_kernel, num_heads=num_heads, d_k=d_k)
    # TODO(synk): on v5e consider pipeline_mode=pl.Buffered(3) on the K/V specs;
    # on v7x re-budget VMEM (64 MiB physical) and consider CORE_PARALLEL axes.
    out = pl.pallas_call(
        kernel,
        out_shape=jax.ShapeDtypeStruct((B, S, D), q.dtype),
        grid_spec=pltpu.PrefetchScalarGridSpec(
            num_scalar_prefetch=0,
            grid=(B, S // tq, S // tkv),
            in_specs=[
                pl.BlockSpec((1, tq, D), lambda b, qi, kv: (b, qi, 0)),
                pl.BlockSpec((1, tkv, D), lambda b, qi, kv: (b, kv, 0)),
                pl.BlockSpec((1, tkv, D), lambda b, qi, kv: (b, kv, 0)),
                pl.BlockSpec((num_heads, d_v, D), lambda b, qi, kv: (0, 0, 0)),  # resident Wo^T
            ],
            out_specs=pl.BlockSpec((1, tq, D), lambda b, qi, kv: (b, qi, 0)),
            scratch_shapes=[
                pltpu.VMEM((num_heads, tq, 1), jnp.float32),      # running row max  m
                pltpu.VMEM((num_heads, tq, 1), jnp.float32),      # running row sum  l
                pltpu.VMEM((num_heads, tq, d_v), jnp.float32),    # per-head attention acc
            ],
        ),
        compiler_params=pltpu.CompilerParams(
            dimension_semantics=("parallel", "parallel", "arbitrary")),
    )(qp, kp, vp, wo_heads)
    return out


# ---------------------------------------------------------------------------
# Pure-JAX reference mirroring the PyTorch forward.
# ---------------------------------------------------------------------------
def reference_mha(q, k, v, wq, wk, wv, wo, num_heads):
    B, S, D = q.shape
    d_k = D // num_heads
    qp = (q @ wq.T).reshape(B, S, num_heads, d_k).transpose(0, 2, 1, 3)
    kp = (k @ wk.T).reshape(B, S, num_heads, d_k).transpose(0, 2, 1, 3)
    vp = (v @ wv.T).reshape(B, S, num_heads, d_k).transpose(0, 2, 1, 3)
    scores = jnp.einsum("bhqd,bhkd->bhqk", qp, kp) / math.sqrt(d_k)
    p = jax.nn.softmax(scores, axis=-1)
    ctx = jnp.einsum("bhqk,bhkd->bhqd", p, vp)
    ctx = ctx.transpose(0, 2, 1, 3).reshape(B, S, D)
    return ctx @ wo.T


if __name__ == "__main__":
    B, S, D, H = 2, 8, 32, 4

    key = jax.random.PRNGKey(0)
    kq, kk, kv_, kwq, kwk, kwv, kwo = jax.random.split(key, 7)

    q = jax.random.normal(kq, (B, S, D), dtype=jnp.float32)
    k = jax.random.normal(kk, (B, S, D), dtype=jnp.float32)
    v = jax.random.normal(kv_, (B, S, D), dtype=jnp.float32)

    # nn.Linear-style init: U(-1/sqrt(in), 1/sqrt(in)), weight [out, in], bias=False.
    bound = 1.0 / math.sqrt(D)
    wq = jax.random.uniform(kwq, (D, D), minval=-bound, maxval=bound, dtype=jnp.float32)
    wk = jax.random.uniform(kwk, (D, D), minval=-bound, maxval=bound, dtype=jnp.float32)
    wv = jax.random.uniform(kwv, (D, D), minval=-bound, maxval=bound, dtype=jnp.float32)
    wo = jax.random.uniform(kwo, (D, D), minval=-bound, maxval=bound, dtype=jnp.float32)

    out = multi_head_attention(q, k, v, wq, wk, wv, wo, num_heads=H)
    out = jax.block_until_ready(out)

    ref = reference_mha(q, k, v, wq, wk, wv, wo, num_heads=H)
    assert out.shape == (B, S, D)
    assert jnp.allclose(out, ref, atol=1e-3, rtol=1e-3), "mismatch vs reference"

    print("KERNEL_OK")
</pallas_src>

<mosaic_0001>
module attributes {stable_mosaic.version = 11 : i64} {
  func.func @qkv_proj_kernel(%arg0: i32, %arg1: i32, %arg2: memref<1x8x32xf32, #tpu.memory_space<vmem>>, %arg3: memref<1x8x32xf32, #tpu.memory_space<vmem>>, %arg4: memref<1x8x32xf32, #tpu.memory_space<vmem>>, %arg5: memref<32x32xf32, #tpu.memory_space<vmem>>, %arg6: memref<32x32xf32, #tpu.memory_space<vmem>>, %arg7: memref<32x32xf32, #tpu.memory_space<vmem>>, %arg8: memref<1x8x32xf32, #tpu.memory_space<vmem>>, %arg9: memref<1x8x32xf32, #tpu.memory_space<vmem>>, %arg10: memref<1x8x32xf32, #tpu.memory_space<vmem>>) attributes {dimension_semantics = [#tpu.dimension_semantics<parallel>, #tpu.dimension_semantics<parallel>], iteration_bounds = array<i64: 2, 1>, scalar_prefetch = 0 : i64, scratch_operands = 0 : i64, tpu.core_type = #tpu.core_type<tc>, window_params = [{transform_indices = @transform_0, window_bounds = array<i64: 1, 8, 32>}, {transform_indices = @transform_1, window_bounds = array<i64: 1, 8, 32>}, {transform_indices = @transform_2, window_bounds = array<i64: 1, 8, 32>}, {pipeline_mode = #tpu.pipeline_mode<synchronous>, transform_indices = @transform_3, window_bounds = array<i64: 32, 32>}, {pipeline_mode = #tpu.pipeline_mode<synchronous>, transform_indices = @transform_4, window_bounds = array<i64: 32, 32>}, {pipeline_mode = #tpu.pipeline_mode<synchronous>, transform_indices = @transform_5, window_bounds = array<i64: 32, 32>}, {transform_indices = @transform_6, window_bounds = array<i64: 1, 8, 32>}, {transform_indices = @transform_7, window_bounds = array<i64: 1, 8, 32>}, {transform_indices = @transform_8, window_bounds = array<i64: 1, 8, 32>}]} {
    %c0 = arith.constant 0 : index
    %c0_0 = arith.constant 0 : index
    %c0_1 = arith.constant 0 : index
    %0 = vector.load %arg2[%c0, %c0_0, %c0_1] : memref<1x8x32xf32, #tpu.memory_space<vmem>>, vector<1x8x32xf32>
    %1 = vector.shape_cast %0 : vector<1x8x32xf32> to vector<8x32xf32>
    %c0_2 = arith.constant 0 : index
    %c0_3 = arith.constant 0 : index
    %2 = vector.load %arg5[%c0_2, %c0_3] : memref<32x32xf32, #tpu.memory_space<vmem>>, vector<32x32xf32>
    %cst = arith.constant dense<0.000000e+00> : vector<8x32xf32>
    %3 = tpu.matmul %1, %2, %cst {dimension_numbers = #tpu.dot_dimension_numbers<[1], [0], [0], [1], [0, 0, 1, 1], [], []>} : vector<8x32xf32>, vector<32x32xf32>, vector<8x32xf32> -> vector<8x32xf32>
    %c0_4 = arith.constant 0 : index
    %c0_5 = arith.constant 0 : index
    %c0_6 = arith.constant 0 : index
    %4 = vector.load %arg8[%c0_4, %c0_5, %c0_6] : memref<1x8x32xf32, #tpu.memory_space<vmem>>, vector<1x8x32xf32>
    %5 = vector.shape_cast %4 : vector<1x8x32xf32> to vector<8x32xf32>
    %6 = vector.shape_cast %3 : vector<8x32xf32> to vector<1x8x32xf32>
    tpu.vector_store %arg8[%c0_4, %c0_5, %c0_6], %6 {strides = array<i32>} : memref<1x8x32xf32, #tpu.memory_space<vmem>>, vector<1x8x32xf32>,
    %c0_7 = arith.constant 0 : index
    %c0_8 = arith.constant 0 : index
    %c0_9 = arith.constant 0 : index
    %7 = vector.load %arg3[%c0_7, %c0_8, %c0_9] : memref<1x8x32xf32, #tpu.memory_space<vmem>>, vector<1x8x32xf32>
    %8 = vector.shape_cast %7 : vector<1x8x32xf32> to vector<8x32xf32>
    %c0_10 = arith.constant 0 : index
    %c0_11 = arith.constant 0 : index
    %9 = vector.load %arg6[%c0_10, %c0_11] : memref<32x32xf32, #tpu.memory_space<vmem>>, vector<32x32xf32>
    %cst_12 = arith.constant dense<0.000000e+00> : vector<8x32xf32>
    %10 = tpu.matmul %8, %9, %cst_12 {dimension_numbers = #tpu.dot_dimension_numbers<[1], [0], [0], [1], [0, 0, 1, 1], [], []>} : vector<8x32xf32>, vector<32x32xf32>, vector<8x32xf32> -> vector<8x32xf32>
    %c0_13 = arith.constant 0 : index
    %c0_14 = arith.constant 0 : index
    %c0_15 = arith.constant 0 : index
    %11 = vector.load %arg9[%c0_13, %c0_14, %c0_15] : memref<1x8x32xf32, #tpu.memory_space<vmem>>, vector<1x8x32xf32>
    %12 = vector.shape_cast %11 : vector<1x8x32xf32> to vector<8x32xf32>
    %13 = vector.shape_cast %10 : vector<8x32xf32> to vector<1x8x32xf32>
    tpu.vector_store %arg9[%c0_13, %c0_14, %c0_15], %13 {strides = array<i32>} : memref<1x8x32xf32, #tpu.memory_space<vmem>>, vector<1x8x32xf32>,
    %c0_16 = arith.constant 0 : index
    %c0_17 = arith.constant 0 : index
    %c0_18 = arith.constant 0 : index
    %14 = vector.load %arg4[%c0_16, %c0_17, %c0_18] : memref<1x8x32xf32, #tpu.memory_space<vmem>>, vector<1x8x32xf32>
    %15 = vector.shape_cast %14 : vector<1x8x32xf32> to vector<8x32xf32>
    %c0_19 = arith.constant 0 : index
    %c0_20 = arith.constant 0 : index
    %16 = vector.load %arg7[%c0_19, %c0_20] : memref<32x32xf32, #tpu.memory_space<vmem>>, vector<32x32xf32>
    %cst_21 = arith.constant dense<0.000000e+00> : vector<8x32xf32>
    %17 = tpu.matmul %15, %16, %cst_21 {dimension_numbers = #tpu.dot_dimension_numbers<[1], [0], [0], [1], [0, 0, 1, 1], [], []>} : vector<8x32xf32>, vector<32x32xf32>, vector<8x32xf32> -> vector<8x32xf32>
    %c0_22 = arith.constant 0 : index
    %c0_23 = arith.constant 0 : index
    %c0_24 = arith.constant 0 : index
    %18 = vector.load %arg10[%c0_22, %c0_23, %c0_24] : memref<1x8x32xf32, #tpu.memory_space<vmem>>, vector<1x8x32xf32>
    %19 = vector.shape_cast %18 : vector<1x8x32xf32> to vector<8x32xf32>
    %20 = vector.shape_cast %17 : vector<8x32xf32> to vector<1x8x32xf32>
    tpu.vector_store %arg10[%c0_22, %c0_23, %c0_24], %20 {strides = array<i32>} : memref<1x8x32xf32, #tpu.memory_space<vmem>>, vector<1x8x32xf32>,
    return
  }
  func.func @transform_0(%arg0: i32, %arg1: i32) -> (i32, i32, i32) {
    %c0_i32 = arith.constant 0 : i32
    %c0_i32_0 = arith.constant 0 : i32
    return %arg0, %arg1, %c0_i32 : i32, i32, i32
  }
  func.func @transform_1(%arg0: i32, %arg1: i32) -> (i32, i32, i32) {
    %c0_i32 = arith.constant 0 : i32
    %c0_i32_0 = arith.constant 0 : i32
    return %arg0, %arg1, %c0_i32 : i32, i32, i32
  }
  func.func @transform_2(%arg0: i32, %arg1: i32) -> (i32, i32, i32) {
    %c0_i32 = arith.constant 0 : i32
    %c0_i32_0 = arith.constant 0 : i32
    return %arg0, %arg1, %c0_i32 : i32, i32, i32
  }
  func.func @transform_3(%arg0: i32, %arg1: i32) -> (i32, i32) {
    %c0_i32 = arith.constant 0 : i32
    %c0_i32_0 = arith.constant 0 : i32
    %c0_i32_1 = arith.constant 0 : i32
    return %c0_i32, %c0_i32_0 : i32, i32
  }
  func.func @transform_4(%arg0: i32, %arg1: i32) -> (i32, i32) {
    %c0_i32 = arith.constant 0 : i32
    %c0_i32_0 = arith.constant 0 : i32
    %c0_i32_1 = arith.constant 0 : i32
    return %c0_i32, %c0_i32_0 : i32, i32
  }
  func.func @transform_5(%arg0: i32, %arg1: i32) -> (i32, i32) {
    %c0_i32 = arith.constant 0 : i32
    %c0_i32_0 = arith.constant 0 : i32
    %c0_i32_1 = arith.constant 0 : i32
    return %c0_i32, %c0_i32_0 : i32, i32
  }
  func.func @transform_6(%arg0: i32, %arg1: i32) -> (i32, i32, i32) {
    %c0_i32 = arith.constant 0 : i32
    %c0_i32_0 = arith.constant 0 : i32
    return %arg0, %arg1, %c0_i32 : i32, i32, i32
  }
  func.func @transform_7(%arg0: i32, %arg1: i32) -> (i32, i32, i32) {
    %c0_i32 = arith.constant 0 : i32
    %c0_i32_0 = arith.constant 0 : i32
    return %arg0, %arg1, %c0_i32 : i32, i32, i32
  }
  func.func @transform_8(%arg0: i32, %arg1: i32) -> (i32, i32, i32) {
    %c0_i32 = arith.constant 0 : i32
    %c0_i32_0 = arith.constant 0 : i32
    return %arg0, %arg1, %c0_i32 : i32, i32, i32
  }
}

</mosaic_0001>

<llo_original>
// kernel: tpu_custom_call.1
$region0: #{tpu_custom_call.1}
  #allocation0 [shape = 'u32[]', space=smem, size = 0x4, offset = 0x4, fixed_abs, tag = 'smem constant byte address 0x4 - core index']
  #allocation1 [shape = 'u32[144,128]{1,0:T(1,128)}', space=vmem, size = 0x12000, scoped, tag = 'internal scratch']
  %s0 = inlined_call_operand.hbm [shape: f32[2,8,32], index: 0, kind: input, shape index: {}]
  %s1 = inlined_call_operand.hbm [shape: f32[2,8,32], index: 1, kind: input, shape index: {}]
  %s2 = inlined_call_operand.hbm [shape: f32[2,8,32], index: 2, kind: input, shape index: {}]
  %s3 = inlined_call_operand.hbm [shape: f32[32,32], index: 3, kind: input, shape index: {}]
  %s4 = inlined_call_operand.hbm [shape: f32[32,32], index: 4, kind: input, shape index: {}]
  %s5 = inlined_call_operand.hbm [shape: f32[32,32], index: 5, kind: input, shape index: {}]
  %s6 = inlined_call_operand.hbm [shape: f32[2,8,32], index: 6, kind: output, shape index: {0}]
  %s7 = inlined_call_operand.hbm [shape: f32[2,8,32], index: 7, kind: output, shape index: {1}]
  %s8 = inlined_call_operand.hbm [shape: f32[2,8,32], index: 8, kind: output, shape index: {2}]
  %9 = xla_tuple %s6, %s7, %s8
  %s10 = sld [smem:[#allocation0]]
  $region97: #{tpu_custom_call.1} parent=0
    _
  %s12 = ssub.s32 1, %s10
  %s13 = scalar_select 0, %s12, %s10
  $region1: #{tpu_custom_call.1} parent=0
    #allocation2 [shape = 'u8[8192]{0}', space=vmem, size = 0x2000, scoped, tag = 'input window, operand 0']
    #allocation3 [shape = 's32[2]{0}', space=sflag, size = 0x8, scoped, tag = 'scoped memory for tpu_custom_call.1']
    #allocation4 [shape = 's32[2]{0}', space=sflag, size = 0x8, scoped, tag = 'scoped memory for tpu_custom_call.1']
    #allocation5 [shape = 'u8[8192]{0}', space=vmem, size = 0x2000, scoped, tag = 'input window, operand 1']
    #allocation6 [shape = 's32[2]{0}', space=sflag, size = 0x8, scoped, tag = 'scoped memory for tpu_custom_call.1']
    #allocation7 [shape = 'u8[8192]{0}', space=vmem, size = 0x2000, scoped, tag = 'input window, operand 2']
    #allocation8 [shape = 'u8[16384]{0}', space=vmem, size = 0x4000, scoped, tag = 'input window, operand 3, single buffered']
    #allocation9 [shape = 's32[1]{0}', space=sflag, size = 0x4, scoped, tag = 'scoped memory for tpu_custom_call.1']
    #allocation10 [shape = 'u8[16384]{0}', space=vmem, size = 0x4000, scoped, tag = 'input window, operand 4, single buffered']
    #allocation11 [shape = 'u8[16384]{0}', space=vmem, size = 0x4000, scoped, tag = 'input window, operand 5, single buffered']
    #allocation12 [shape = 's32[1]{0}', space=sflag, size = 0x4, scoped, tag = 'scoped memory for tpu_custom_call.1']
    #allocation13 [shape = 'u8[8192]{0}', space=vmem, size = 0x2000, scoped, tag = 'output window, operand 0']
    #allocation14 [shape = 'u8[8192]{0}', space=vmem, size = 0x2000, scoped, tag = 'output window, operand 1']
    #allocation15 [shape = 's32[2]{0}', space=sflag, size = 0x8, scoped, tag = 'scoped memory for tpu_custom_call.1']
    #allocation16 [shape = 'u8[8192]{0}', space=vmem, size = 0x2000, scoped, tag = 'output window, operand 2']
    %14 = vsyncpa [#allocation3], 0
    %s15 = scalar_lea.sflag [#allocation3], 1
    %16 = vsyncpa %s15, 0
    %17 = vsyncpa [#allocation6], 0
    %s18 = scalar_lea.sflag [#allocation6], 1
    %19 = vsyncpa %s18, 0
    %20 = vsyncpa [#allocation9], 0
    %21 = vsyncpa [#allocation12], 0
    %22 = vsyncpa [#allocation4], 0
    %s23 = scalar_lea.sflag [#allocation4], 1
    %24 = vsyncpa %s23, 0
    %25 = vsyncpa [#allocation15], 0
    %s26 = scalar_lea.sflag [#allocation15], 1
    %27 = vsyncpa %s26, 0
    loop: start=0, step=1, limit=4
    $region2: #{tpu_custom_call.1} parent=1 // loop_pre_header
      _
    $region3: #{tpu_custom_call.1} parent=1 // loop_header
      %s29 = sphi 0, %s33
      %p30 = scmp.ge.s32.totalorder %s29, 4
      %s36 = sphi 0, %s48
      %s37 = sphi 0, %s44
      %s38 = sphi 0, %s36
      %s39 = sphi 0, %s37
      %s40 = sphi 0, %s38
      %s41 = sphi 0, %s39
      %s53 = sphi 0, %s55
      %s56 = sphi 0, %s53
      %s57 = sphi 0, %s56
      %s73 = sphi 0, %s57
      %s81 = sphi 0, %s83
      %s84 = sphi 0, %s81
      %s85 = sphi 0, %s84
      %s101 = sphi 0, %s85
      %s109 = sphi 0, %s111
      %s112 = sphi 0, %s109
      %s113 = sphi 0, %s112
      %s129 = sphi 0, %s113
      %s133 = sphi 0, %s133
      %s135 = sphi 0, %s133
      %s136 = sphi 0, %s135
      %s150 = sphi 0, %s136
      %s154 = sphi 0, %s154
      %s156 = sphi 0, %s154
      %s157 = sphi 0, %s156
      %s171 = sphi 0, %s157
      %s175 = sphi 0, %s175
      %s177 = sphi 0, %s175
      %s178 = sphi 0, %s177
      %s192 = sphi 0, %s178
      %s200 = sphi 0, %s202
      %s203 = sphi 0, %s200
      %s204 = sphi 0, %s203
      %s220 = sphi 0, %s204
      %s228 = sphi 0, %s230
      %s231 = sphi 0, %s228
      %s232 = sphi 0, %s231
      %s248 = sphi 0, %s232
      %s256 = sphi 0, %s258
      %s259 = sphi 0, %s256
      %s260 = sphi 0, %s259
      %s276 = sphi 0, %s260
    $region4: #{tpu_custom_call.1} parent=1 // loop_header_branch
      %32 = sbr.rel (%p30) target = $region8
    $region5: #{tpu_custom_call.1} parent=1 // loop_body
      %s34 = ssub.s32 %s29, 1
      %s35 = ssub.s32 %s29, 2
      %s42 = sadd.s32 1, %s37
      %p43 = scmp.ge.s32.totalorder %s42, 1
      %s44 = scalar_select %p43, 0, %s42
      %s45 = sadd.s32 1, %s36
      %s46 = scalar_select %p43, %s45, %s36
      %p47 = scmp.ge.s32.totalorder %s46, 2
      %s48 = scalar_select %p47, 0, %s46
      %s49 = ssub.s32 %s36, %s48
      %s50 = ssub.s32 %s37, %s44
      %s51 = sor.u32 %s49, %s50
      %p52 = scmp.eq.s32.totalorder %s51, 0
      %s54 = sadd.s32 %s53, 1
      %s55 = scalar_select %p52, %s53, %s54
      %p58 = pneg %p52
      %p59 = scmp.eq.s32.totalorder %s29, 1
      %p60 = por %p58, %p59
      %p61 = scmp.ne.s32.totalorder %s53, %s56
      %p62 = scmp.eq.s32.totalorder %s29, 0
      %p63 = por %p61, %p62
      %p64 = scmp.ne.s32.totalorder %s53, %s56
      %p65 = scmp.eq.s32.totalorder %s34, 1
      %p66 = por %p64, %p65
      %p67 = scmp.ne.s32.totalorder %s56, %s57
      %p68 = scmp.eq.s32.totalorder %s34, 0
      %p69 = por %p67, %p68
      %p70 = scmp.ne.s32.totalorder %s56, %s57
      %p71 = scmp.eq.s32.totalorder %s35, 1
      %p72 = por %p70, %p71
      %p74 = scmp.ne.s32.totalorder %s57, %s73
      %p75 = scmp.eq.s32.totalorder %s35, 0
      %p76 = por %p74, %p75
      %s77 = ssub.s32 %s36, %s48
      %s78 = ssub.s32 %s37, %s44
      %s79 = sor.u32 %s77, %s78
      %p80 = scmp.eq.s32.totalorder %s79, 0
      %s82 = sadd.s32 %s81, 1
      %s83 = scalar_select %p80, %s81, %s82
      %p86 = pneg %p80
      %p87 = scmp.eq.s32.totalorder %s29, 1
      %p88 = por %p86, %p87
      %p89 = scmp.ne.s32.totalorder %s81, %s84
      %p90 = scmp.eq.s32.totalorder %s29, 0
      %p91 = por %p89, %p90
      %p92 = scmp.ne.s32.totalorder %s81, %s84
      %p93 = scmp.eq.s32.totalorder %s34, 1
      %p94 = por %p92, %p93
      %p95 = scmp.ne.s32.totalorder %s84, %s85
      %p96 = scmp.eq.s32.totalorder %s34, 0
      %p97 = por %p95, %p96
      %p98 = scmp.ne.s32.totalorder %s84, %s85
      %p99 = scmp.eq.s32.totalorder %s35, 1
      %p100 = por %p98, %p99
      %p102 = scmp.ne.s32.totalorder %s85, %s101
      %p103 = scmp.eq.s32.totalorder %s35, 0
      %p104 = por %p102, %p103
      %s105 = ssub.s32 %s36, %s48
      %s106 = ssub.s32 %s37, %s44
      %s107 = sor.u32 %s105, %s106
      %p108 = scmp.eq.s32.totalorder %s107, 0
      %s110 = sadd.s32 %s109, 1
      %s111 = scalar_select %p108, %s109, %s110
      %p114 = pneg %p108
      %p115 = scmp.eq.s32.totalorder %s29, 1
      %p116 = por %p114, %p115
      %p117 = scmp.ne.s32.totalorder %s109, %s112
      %p118 = scmp.eq.s32.totalorder %s29, 0
      %p119 = por %p117, %p118
      %p120 = scmp.ne.s32.totalorder %s109, %s112
      %p121 = scmp.eq.s32.totalorder %s34, 1
      %p122 = por %p120, %p121
      %p123 = scmp.ne.s32.totalorder %s112, %s113
      %p124 = scmp.eq.s32.totalorder %s34, 0
      %p125 = por %p123, %p124
      %p126 = scmp.ne.s32.totalorder %s112, %s113
      %p127 = scmp.eq.s32.totalorder %s35, 1
      %p128 = por %p126, %p127
      %p130 = scmp.ne.s32.totalorder %s113, %s129
      %p131 = scmp.eq.s32.totalorder %s35, 0
      %p132 = por %p130, %p131
      %s134 = sadd.s32 %s133, 1
      %p137 = scmp.eq.s32.totalorder %s29, 1
      %p138 = scmp.ne.s32.totalorder %s133, %s135
      %p139 = scmp.eq.s32.totalorder %s29, 0
      %p140 = por %p138, %p139
      %p141 = scmp.ne.s32.totalorder %s133, %s135
      %p142 = scmp.eq.s32.totalorder %s34, 1
      %p143 = por %p141, %p142
      %p144 = scmp.ne.s32.totalorder %s135, %s136
      %p145 = scmp.eq.s32.totalorder %s34, 0
      %p146 = por %p144, %p145
      %p147 = scmp.ne.s32.totalorder %s135, %s136
      %p148 = scmp.eq.s32.totalorder %s35, 1
      %p149 = por %p147, %p148
      %p151 = scmp.ne.s32.totalorder %s136, %s150
      %p152 = scmp.eq.s32.totalorder %s35, 0
      %p153 = por %p151, %p152
      %s155 = sadd.s32 %s154, 1
      %p158 = scmp.eq.s32.totalorder %s29, 1
      %p159 = scmp.ne.s32.totalorder %s154, %s156
      %p160 = scmp.eq.s32.totalorder %s29, 0
      %p161 = por %p159, %p160
      %p162 = scmp.ne.s32.totalorder %s154, %s156
      %p163 = scmp.eq.s32.totalorder %s34, 1
      %p164 = por %p162, %p163
      %p165 = scmp.ne.s32.totalorder %s156, %s157
      %p166 = scmp.eq.s32.totalorder %s34, 0
      %p167 = por %p165, %p166
      %p168 = scmp.ne.s32.totalorder %s156, %s157
      %p169 = scmp.eq.s32.totalorder %s35, 1
      %p170 = por %p168, %p169
      %p172 = scmp.ne.s32.totalorder %s157, %s171
      %p173 = scmp.eq.s32.totalorder %s35, 0
      %p174 = por %p172, %p173
      %s176 = sadd.s32 %s175, 1
      %p179 = scmp.eq.s32.totalorder %s29, 1
      %p180 = scmp.ne.s32.totalorder %s175, %s177
      %p181 = scmp.eq.s32.totalorder %s29, 0
      %p182 = por %p180, %p181
      %p183 = scmp.ne.s32.totalorder %s175, %s177
      %p184 = scmp.eq.s32.totalorder %s34, 1
      %p185 = por %p183, %p184
      %p186 = scmp.ne.s32.totalorder %s177, %s178
      %p187 = scmp.eq.s32.totalorder %s34, 0
      %p188 = por %p186, %p187
      %p189 = scmp.ne.s32.totalorder %s177, %s178
      %p190 = scmp.eq.s32.totalorder %s35, 1
      %p191 = por %p189, %p190
      %p193 = scmp.ne.s32.totalorder %s178, %s192
      %p194 = scmp.eq.s32.totalorder %s35, 0
      %p195 = por %p193, %p194
      %s196 = ssub.s32 %s36, %s48
      %s197 = ssub.s32 %s37, %s44
      %s198 = sor.u32 %s196, %s197
      %p199 = scmp.eq.s32.totalorder %s198, 0
      %s201 = sadd.s32 %s200, 1
      %s202 = scalar_select %p199, %s200, %s201
      %p205 = pneg %p199
      %p206 = scmp.eq.s32.totalorder %s29, 1
      %p207 = por %p205, %p206
      %p208 = scmp.ne.s32.totalorder %s200, %s203
      %p209 = scmp.eq.s32.totalorder %s29, 0
      %p210 = por %p208, %p209
      %p211 = scmp.ne.s32.totalorder %s200, %s203
      %p212 = scmp.eq.s32.totalorder %s34, 1
      %p213 = por %p211, %p212
      %p214 = scmp.ne.s32.totalorder %s203, %s204
      %p215 = scmp.eq.s32.totalorder %s34, 0
      %p216 = por %p214, %p215
      %p217 = scmp.ne.s32.totalorder %s203, %s204
      %p218 = scmp.eq.s32.totalorder %s35, 1
      %p219 = por %p217, %p218
      %p221 = scmp.ne.s32.totalorder %s204, %s220
      %p222 = scmp.eq.s32.totalorder %s35, 0
      %p223 = por %p221, %p222
      %s224 = ssub.s32 %s36, %s48
      %s225 = ssub.s32 %s37, %s44
      %s226 = sor.u32 %s224, %s225
      %p227 = scmp.eq.s32.totalorder %s226, 0
      %s229 = sadd.s32 %s228, 1
      %s230 = scalar_select %p227, %s228, %s229
      %p233 = pneg %p227
      %p234 = scmp.eq.s32.totalorder %s29, 1
      %p235 = por %p233, %p234
      %p236 = scmp.ne.s32.totalorder %s228, %s231
      %p237 = scmp.eq.s32.totalorder %s29, 0
      %p238 = por %p236, %p237
      %p239 = scmp.ne.s32.totalorder %s228, %s231
      %p240 = scmp.eq.s32.totalorder %s34, 1
      %p241 = por %p239, %p240
      %p242 = scmp.ne.s32.totalorder %s231, %s232
      %p243 = scmp.eq.s32.totalorder %s34, 0
      %p244 = por %p242, %p243
      %p245 = scmp.ne.s32.totalorder %s231, %s232
      %p246 = scmp.eq.s32.totalorder %s35, 1
      %p247 = por %p245, %p246
      %p249 = scmp.ne.s32.totalorder %s232, %s248
      %p250 = scmp.eq.s32.totalorder %s35, 0
      %p251 = por %p249, %p250
      %s252 = ssub.s32 %s36, %s48
      %s253 = ssub.s32 %s37, %s44
      %s254 = sor.u32 %s252, %s253
      %p255 = scmp.eq.s32.totalorder %s254, 0
      %s257 = sadd.s32 %s256, 1
      %s258 = scalar_select %p255, %s256, %s257
      %p261 = pneg %p255
      %p262 = scmp.eq.s32.totalorder %s29, 1
      %p263 = por %p261, %p262
      %p264 = scmp.ne.s32.totalorder %s256, %s259
      %p265 = scmp.eq.s32.totalorder %s29, 0
      %p266 = por %p264, %p265
      %p267 = scmp.ne.s32.totalorder %s256, %s259
      %p268 = scmp.eq.s32.totalorder %s34, 1
      %p269 = por %p267, %p268
      %p270 = scmp.ne.s32.totalorder %s259, %s260
      %p271 = scmp.eq.s32.totalorder %s34, 0
      %p272 = por %p270, %p271
      %p273 = scmp.ne.s32.totalorder %s259, %s260
      %p274 = scmp.eq.s32.totalorder %s35, 1
      %p275 = por %p273, %p274
      %p277 = scmp.ne.s32.totalorder %s260, %s276
      %p278 = scmp.eq.s32.totalorder %s35, 0
      %p279 = por %p277, %p278
      %p280 = scmp.le.s32.totalorder 1, %s29
      %p281 = scmp.lt.s32.totalorder %s29, 3
      %p282 = pnand %p280, %p281
      %p283 = pneg %p282
      // Predicated region
      $region9: #{tpu_custom_call.1} parent=5 // pred_check
        _
      $region10: #{tpu_custom_call.1} parent=5 // pred_check_branch
        %285 = sbr.rel (%p282) target = $region12
      $region11: #{tpu_custom_call.1} parent=5 // pred_region
        %s286 = ssub.s32 %s29, 1
        // Predicated region
        $region13: #{tpu_custom_call.1} parent=11 // pred_check
          %p287 = pneg %p146
        $region14: #{tpu_custom_call.1} parent=11 // pred_check_branch
          %289 = sbr.rel (%p287) target = $region16
        $region15: #{tpu_custom_call.1} parent=11 // pred_region
          %s291 = ssub.s32 512, 512
          %292 = vsyncadd [#allocation9], %s291
          %s293 = sshll.u32 [#allocation8], 4
          %s294 = int_to_ptr.vmem [resolvable:$true] %s293
          %299 = dma.hbm_to_vmem [thread:$0]  %s3, 512, %s294, [#allocation9], 128, 128, 8
        $region16: #{tpu_custom_call.1} parent=11 // pred_fallthru
          _
        // Predicated region
        $region17: #{tpu_custom_call.1} parent=11 // pred_check
          %p300 = pneg %p167
        $region18: #{tpu_custom_call.1} parent=11 // pred_check_branch
          %302 = sbr.rel (%p300) target = $region20
        $region19: #{tpu_custom_call.1} parent=11 // pred_region
          %s304 = ssub.s32 512, 512
          %305 = vsyncadd [#allocation9], %s304
          %s306 = sshll.u32 [#allocation10], 4
          %s307 = int_to_ptr.vmem [resolvable:$true] %s306
          %312 = dma.hbm_to_vmem [thread:$0]  %s4, 512, %s307, [#allocation9], 128, 128, 8
        $region20: #{tpu_custom_call.1} parent=11 // pred_fallthru
          _
        // Predicated region
        $region21: #{tpu_custom_call.1} parent=11 // pred_check
          %p313 = pneg %p188
        $region22: #{tpu_custom_call.1} parent=11 // pred_check_branch
          %315 = sbr.rel (%p313) target = $region24
        $region23: #{tpu_custom_call.1} parent=11 // pred_region
          %s317 = ssub.s32 512, 512
          %318 = vsyncadd [#allocation12], %s317
          %s319 = sshll.u32 [#allocation11], 4
          %s320 = int_to_ptr.vmem [resolvable:$true] %s319
          %325 = dma.hbm_to_vmem [thread:$0]  %s5, 512, %s320, [#allocation12], 128, 128, 8
        $region24: #{tpu_custom_call.1} parent=11 // pred_fallthru
          _
      $region12: #{tpu_custom_call.1} parent=5 // pred_fallthru
        _
      %p326 = scmp.lt.s32.totalorder %s29, 2
      // Predicated region
      $region25: #{tpu_custom_call.1} parent=5 // pred_check
        %p327 = pneg %p326
      $region26: #{tpu_custom_call.1} parent=5 // pred_check_branch
        %329 = sbr.rel (%p327) target = $region28
      $region27: #{tpu_custom_call.1} parent=5 // pred_region
        // Predicated region
        $region29: #{tpu_custom_call.1} parent=27 // pred_check
          %p330 = pneg %p63
        $region30: #{tpu_custom_call.1} parent=27 // pred_check_branch
          %332 = sbr.rel (%p330) target = $region32
        $region31: #{tpu_custom_call.1} parent=27 // pred_region
          %s333 = sand.u32 %s53, 1
          %s334 = scalar_lea.sflag [#allocation3], %s333
          %s335 = sand.u32 %s53, 1
          %s336 = smul.addr %s335, 8
          %s337 = scalar_lea.vmem [#allocation2], %s336
          %s339 = ssub.s32 128, 128
          %340 = vsyncadd %s334, %s339
          %s341 = sadd.s32 %s37, %s36
          %s342 = smul.addr %s341, 128
          %s343 = scalar_lea.hbm %s0, %s342
          %s345 = sshll.u32 %s337, 4
          %s346 = int_to_ptr.vmem [resolvable:$true] %s345
          %348 = dma.hbm_to_vmem [thread:$0]  %s343, 128, %s346, %s334
        $region32: #{tpu_custom_call.1} parent=27 // pred_fallthru
          _
        // Predicated region
        $region33: #{tpu_custom_call.1} parent=27 // pred_check
          %p349 = pneg %p91
        $region34: #{tpu_custom_call.1} parent=27 // pred_check_branch
          %351 = sbr.rel (%p349) target = $region36
        $region35: #{tpu_custom_call.1} parent=27 // pred_region
          %s352 = sand.u32 %s29, 1
          %s353 = scalar_lea.sflag [#allocation6], %s352
          %s354 = sand.u32 %s81, 1
          %s355 = smul.addr %s354, 8
          %s356 = scalar_lea.vmem [#allocation5], %s355
          %s358 = ssub.s32 128, 128
          %359 = vsyncadd %s353, %s358
          %s360 = sadd.s32 %s37, %s36
          %s361 = smul.addr %s360, 128
          %s362 = scalar_lea.hbm %s1, %s361
          %s364 = sshll.u32 %s356, 4
          %s365 = int_to_ptr.vmem [resolvable:$true] %s364
          %367 = dma.hbm_to_vmem [thread:$0]  %s362, 128, %s365, %s353
        $region36: #{tpu_custom_call.1} parent=27 // pred_fallthru
          _
        // Predicated region
        $region37: #{tpu_custom_call.1} parent=27 // pred_check
          %p368 = pneg %p119
        $region38: #{tpu_custom_call.1} parent=27 // pred_check_branch
          %370 = sbr.rel (%p368) target = $region40
        $region39: #{tpu_custom_call.1} parent=27 // pred_region
          %s371 = sand.u32 %s29, 1
          %s372 = scalar_lea.sflag [#allocation6], %s371
          %s373 = sand.u32 %s109, 1
          %s374 = smul.addr %s373, 8
          %s375 = scalar_lea.vmem [#allocation7], %s374
          %s377 = ssub.s32 128, 128
          %378 = vsyncadd %s372, %s377
          %s379 = sadd.s32 %s37, %s36
          %s380 = smul.addr %s379, 128
          %s381 = scalar_lea.hbm %s2, %s380
          %s383 = sshll.u32 %s375, 4
          %s384 = int_to_ptr.vmem [resolvable:$true] %s383
          %386 = dma.hbm_to_vmem [thread:$0]  %s381, 128, %s384, %s372
        $region40: #{tpu_custom_call.1} parent=27 // pred_fallthru
          _
      $region28: #{tpu_custom_call.1} parent=5 // pred_fallthru
        _
      %p387 = scmp.le.s32.totalorder 1, %s29
      %p388 = scmp.lt.s32.totalorder %s29, 3
      %p389 = pnand %p387, %p388
      %p390 = pneg %p389
      // Predicated region
      $region41: #{tpu_custom_call.1} parent=5 // pred_check
        _
      $region42: #{tpu_custom_call.1} parent=5 // pred_check_branch
        %392 = sbr.rel (%p389) target = $region44
      $region43: #{tpu_custom_call.1} parent=5 // pred_region
        %s393 = ssub.s32 %s29, 1
        %s394 = sand.u32 %s56, 1
        %s395 = scalar_lea.sflag [#allocation3], %s394
        %s396 = sand.u32 %s56, 1
        %s397 = smul.addr %s396, 8
        %s398 = scalar_lea.vmem [#allocation2], %s397
        // Predicated region
        $region45: #{tpu_custom_call.1} parent=43 // pred_check
          %p399 = pneg %p69
        $region46: #{tpu_custom_call.1} parent=43 // pred_check_branch
          %401 = sbr.rel (%p399) target = $region48
        $region47: #{tpu_custom_call.1} parent=43 // pred_region
          %402 = dma.done %s395, 128
        $region48: #{tpu_custom_call.1} parent=43 // pred_fallthru
          _
        %s403 = sand.u32 %s34, 1
        %s404 = scalar_lea.sflag [#allocation6], %s403
        %s405 = sand.u32 %s84, 1
        %s406 = smul.addr %s405, 8
        %s407 = scalar_lea.vmem [#allocation5], %s406
        // Predicated region
        $region49: #{tpu_custom_call.1} parent=43 // pred_check
          %p408 = pneg %p97
        $region50: #{tpu_custom_call.1} parent=43 // pred_check_branch
          %410 = sbr.rel (%p408) target = $region52
        $region51: #{tpu_custom_call.1} parent=43 // pred_region
          %411 = dma.done %s404, 128
        $region52: #{tpu_custom_call.1} parent=43 // pred_fallthru
          _
        %s412 = sand.u32 %s34, 1
        %s413 = scalar_lea.sflag [#allocation6], %s412
        %s414 = sand.u32 %s112, 1
        %s415 = smul.addr %s414, 8
        %s416 = scalar_lea.vmem [#allocation7], %s415
        // Predicated region
        $region53: #{tpu_custom_call.1} parent=43 // pred_check
          %p417 = pneg %p125
        $region54: #{tpu_custom_call.1} parent=43 // pred_check_branch
          %419 = sbr.rel (%p417) target = $region56
        $region55: #{tpu_custom_call.1} parent=43 // pred_region
          %420 = dma.done %s413, 128
        $region56: #{tpu_custom_call.1} parent=43 // pred_fallthru
          _
        // Predicated region
        $region57: #{tpu_custom_call.1} parent=43 // pred_check
          %p421 = pneg %p146
        $region58: #{tpu_custom_call.1} parent=43 // pred_check_branch
          %423 = sbr.rel (%p421) target = $region60
        $region59: #{tpu_custom_call.1} parent=43 // pred_region
          %424 = dma.done [#allocation9], 512
        $region60: #{tpu_custom_call.1} parent=43 // pred_fallthru
          _
        // Predicated region
        $region61: #{tpu_custom_call.1} parent=43 // pred_check
          %p425 = pneg %p167
        $region62: #{tpu_custom_call.1} parent=43 // pred_check_branch
          %427 = sbr.rel (%p425) target = $region64
        $region63: #{tpu_custom_call.1} parent=43 // pred_region
          %428 = dma.done [#allocation9], 512
        $region64: #{tpu_custom_call.1} parent=43 // pred_fallthru
          _
        // Predicated region
        $region65: #{tpu_custom_call.1} parent=43 // pred_check
          %p429 = pneg %p188
        $region66: #{tpu_custom_call.1} parent=43 // pred_check_branch
          %431 = sbr.rel (%p429) target = $region68
        $region67: #{tpu_custom_call.1} parent=43 // pred_region
          %432 = dma.done [#allocation12], 512
        $region68: #{tpu_custom_call.1} parent=43 // pred_fallthru
          _
        %s433 = sand.u32 %s56, 1
        %s434 = scalar_lea.sflag [#allocation3], %s433
        %s435 = sand.u32 %s56, 1
        %s436 = smul.addr %s435, 8
        %s437 = scalar_lea.vmem [#allocation2], %s436
        %p438 = pneg %p69
        %p439 = pneg %p66
        %s440 = sand.u32 %s34, 1
        %s441 = scalar_lea.sflag [#allocation6], %s440
        %s442 = sand.u32 %s84, 1
        %s443 = smul.addr %s442, 8
        %s444 = scalar_lea.vmem [#allocation5], %s443
        %p445 = pneg %p97
        %p446 = pneg %p94
        %s447 = sand.u32 %s34, 1
        %s448 = scalar_lea.sflag [#allocation6], %s447
        %s449 = sand.u32 %s112, 1
        %s450 = smul.addr %s449, 8
        %s451 = scalar_lea.vmem [#allocation7], %s450
        %p452 = pneg %p125
        %p453 = pneg %p122
        %p454 = pneg %p146
        %p455 = pneg %p143
        %p456 = pneg %p167
        %p457 = pneg %p164
        %p458 = pneg %p188
        %p459 = pneg %p185
        %p460 = pneg %p216
        %p461 = pneg %p213
        %s462 = sand.u32 %s203, 1
        %s463 = scalar_lea.sflag [#allocation4], %s462
        %s464 = sand.u32 %s203, 1
        %s465 = smul.addr %s464, 8
        %s466 = scalar_lea.vmem [#allocation13], %s465
        %p467 = pneg %p244
        %p468 = pneg %p241
        %s469 = sand.u32 %s34, 1
        %s470 = scalar_lea.sflag [#allocation15], %s469
        %s471 = sand.u32 %s231, 1
        %s472 = smul.addr %s471, 8
        %s473 = scalar_lea.vmem [#allocation14], %s472
        %p474 = pneg %p272
        %p475 = pneg %p269
        %s476 = sand.u32 %s34, 1
        %s477 = scalar_lea.sflag [#allocation15], %s476
        %s478 = sand.u32 %s259, 1
        %s479 = smul.addr %s478, 8
        %s480 = scalar_lea.vmem [#allocation16], %s479
        %v481 = vld [vmem:[%s398] sm:$0xff]
        %v482 = vld [vmem:[#allocation8] sm:$0xff]
        %v483 = vld [vmem:[#allocation8 + $0x8] sm:$0xff]
        %v484 = vld [vmem:[#allocation8 + $0x10] sm:$0xff]
        %v485 = vld [vmem:[#allocation8 + $0x18] sm:$0xff]
        %vm486 = vcmask 261120
        %v488 = vsel %vm486, %v481, 0
        %490 = vmatprep.subr.mxu0 0.0
        %491 = vmatpush1.msra.mxu0 %v482
        %492 = vmatprep.subr.mxu0 0.0
        %493 = vmatpush1.msra.mxu0 %v483
        %494 = vmatprep.subr.mxu0 0.0
        %495 = vmatpush1.msra.mxu0 %v484
        %496 = vmatprep.subr.mxu0 0.0
        %497 = vmatpush1.msra.mxu0 %v485
        %498 = vmatprep.subr.mxu0 0.0
        %499 = vmatpush1.msra.mxu0 0.0
        %500 = vmatprep.subr.mxu0 0.0
        %501 = vmatpush1.msra.mxu0 0.0
        %502 = vmatprep.subr.mxu0 0.0
        %503 = vmatpush1.msra.mxu0 0.0
        %504 = vmatprep.subr.mxu0 0.0
        %505 = vmatpush1.msra.mxu0 0.0
        %506 = vmatprep.subr.mxu0 0.0
        %507 = vmatpush1.msra.mxu0 0.0
        %508 = vmatprep.subr.mxu0 0.0
        %509 = vmatpush1.msra.mxu0 0.0
        %510 = vmatprep.subr.mxu0 0.0
        %511 = vmatpush1.msra.mxu0 0.0
        %512 = vmatprep.subr.mxu0 0.0
        %513 = vmatpush1.msra.mxu0 0.0
        %514 = vmatprep.subr.mxu0 0.0
        %515 = vmatpush1.msra.mxu0 0.0
        %516 = vmatprep.subr.mxu0 0.0
        %517 = vmatpush1.msra.mxu0 0.0
        %518 = vmatprep.subr.mxu0 0.0
        %519 = vmatpush1.msra.mxu0 0.0
        %520 = vmatprep.subr.mxu0 0.0
        %521 = vmatpush1.msra.mxu0 0.0
        %522 = vmatprep.subr.mxu0 0.0
        %523 = vmatpush1.msra.mxu0 0.0
        %524 = vmatprep.subr.mxu0 0.0
        %525 = vmatpush1.msra.mxu0 0.0
        %526 = vmatprep.subr.mxu0 0.0
        %527 = vmatpush1.msra.mxu0 0.0
        %528 = vmatprep.subr.mxu0 0.0
        %529 = vmatpush1.msra.mxu0 0.0
        %530 = vmatprep.subr.mxu0 0.0
        %531 = vmatpush1.msra.mxu0 0.0
        %532 = vmatprep.subr.mxu0 0.0
        %533 = vmatpush1.msra.mxu0 0.0
        %534 = vmatprep.subr.mxu0 0.0
        %535 = vmatpush1.msra.mxu0 0.0
        %536 = vmatprep.subr.mxu0 0.0
        %537 = vmatpush1.msra.mxu0 0.0
        %538 = vmatprep.subr.mxu0 0.0
        %539 = vmatpush1.msra.mxu0 0.0
        %540 = vmatprep.subr.mxu0 0.0
        %541 = vmatpush1.msra.mxu0 0.0
        %542 = vmatprep.subr.mxu0 0.0
        %543 = vmatpush1.msra.mxu0 0.0
        %544 = vmatprep.subr.mxu0 0.0
        %545 = vmatpush1.msra.mxu0 0.0
        %546 = vmatprep.subr.mxu0 0.0
        %547 = vmatpush1.msra.mxu0 0.0
        %548 = vmatprep.subr.mxu0 0.0
        %549 = vmatpush1.msra.mxu0 0.0
        %550 = vmatprep.subr.mxu0 0.0
        %551 = vmatpush1.msra.mxu0 0.0
        %552 = vmatprep.subr.mxu0 0.0
        %553 = vmatpush1.msra.mxu0 0.0
        %554 = vmatprep.mubr.f32.mxu0 0.0
        %555 = vmatmul.mubr.f32.gmra.mrb[0].mxu0 %v488
        %v556 = vpop.f32.mrb[0].mxu0
        %v557 = vadd.f32 0.0, %v556
        %v558 = vpop.f32.mrb[0].mxu0
        %559 = vdwg.mxu0
        %560 = vst.msk [vmem:[%s466] sm:$0xff] %vm486, %v557
        %v561 = vld [vmem:[%s407] sm:$0xff]
        %v562 = vld [vmem:[#allocation10] sm:$0xff]
        %v563 = vld [vmem:[#allocation10 + $0x8] sm:$0xff]
        %v564 = vld [vmem:[#allocation10 + $0x10] sm:$0xff]
        %v565 = vld [vmem:[#allocation10 + $0x18] sm:$0xff]
        %v567 = vsel %vm486, %v561, 0
        %569 = vmatprep.subr.mxu0 0.0
        %570 = vmatpush1.msra.mxu0 %v562
        %571 = vmatprep.subr.mxu0 0.0
        %572 = vmatpush1.msra.mxu0 %v563
        %573 = vmatprep.subr.mxu0 0.0
        %574 = vmatpush1.msra.mxu0 %v564
        %575 = vmatprep.subr.mxu0 0.0
        %576 = vmatpush1.msra.mxu0 %v565
        %577 = vmatprep.subr.mxu0 0.0
        %578 = vmatpush1.msra.mxu0 0.0
        %579 = vmatprep.subr.mxu0 0.0
        %580 = vmatpush1.msra.mxu0 0.0
        %581 = vmatprep.subr.mxu0 0.0
        %582 = vmatpush1.msra.mxu0 0.0
        %583 = vmatprep.subr.mxu0 0.0
        %584 = vmatpush1.msra.mxu0 0.0
        %585 = vmatprep.subr.mxu0 0.0
        %586 = vmatpush1.msra.mxu0 0.0
        %587 = vmatprep.subr.mxu0 0.0
        %588 = vmatpush1.msra.mxu0 0.0
        %589 = vmatprep.subr.mxu0 0.0
        %590 = vmatpush1.msra.mxu0 0.0
        %591 = vmatprep.subr.mxu0 0.0
        %592 = vmatpush1.msra.mxu0 0.0
        %593 = vmatprep.subr.mxu0 0.0
        %594 = vmatpush1.msra.mxu0 0.0
        %595 = vmatprep.subr.mxu0 0.0
        %596 = vmatpush1.msra.mxu0 0.0
        %597 = vmatprep.subr.mxu0 0.0
        %598 = vmatpush1.msra.mxu0 0.0
        %599 = vmatprep.subr.mxu0 0.0
        %600 = vmatpush1.msra.mxu0 0.0
        %601 = vmatprep.subr.mxu0 0.0
        %602 = vmatpush1.msra.mxu0 0.0
        %603 = vmatprep.subr.mxu0 0.0
        %604 = vmatpush1.msra.mxu0 0.0
        %605 = vmatprep.subr.mxu0 0.0
        %606 = vmatpush1.msra.mxu0 0.0
        %607 = vmatprep.subr.mxu0 0.0
        %608 = vmatpush1.msra.mxu0 0.0
        %609 = vmatprep.subr.mxu0 0.0
        %610 = vmatpush1.msra.mxu0 0.0
        %611 = vmatprep.subr.mxu0 0.0
        %612 = vmatpush1.msra.mxu0 0.0
        %613 = vmatprep.subr.mxu0 0.0
        %614 = vmatpush1.msra.mxu0 0.0
        %615 = vmatprep.subr.mxu0 0.0
        %616 = vmatpush1.msra.mxu0 0.0
        %617 = vmatprep.subr.mxu0 0.0
        %618 = vmatpush1.msra.mxu0 0.0
        %619 = vmatprep.subr.mxu0 0.0
        %620 = vmatpush1.msra.mxu0 0.0
        %621 = vmatprep.subr.mxu0 0.0
        %622 = vmatpush1.msra.mxu0 0.0
        %623 = vmatprep.subr.mxu0 0.0
        %624 = vmatpush1.msra.mxu0 0.0
        %625 = vmatprep.subr.mxu0 0.0
        %626 = vmatpush1.msra.mxu0 0.0
        %627 = vmatprep.subr.mxu0 0.0
        %628 = vmatpush1.msra.mxu0 0.0
        %629 = vmatprep.subr.mxu0 0.0
        %630 = vmatpush1.msra.mxu0 0.0
        %631 = vmatprep.subr.mxu0 0.0
        %632 = vmatpush1.msra.mxu0 0.0
        %633 = vmatprep.mubr.f32.mxu0 0.0
        %634 = vmatmul.mubr.f32.gmra.mrb[0].mxu0 %v567
        %v635 = vpop.f32.mrb[0].mxu0
        %v636 = vadd.f32 0.0, %v635
        %v637 = vpop.f32.mrb[0].mxu0
        %638 = vdwg.mxu0
        %639 = vst.msk [vmem:[%s473] sm:$0xff] %vm486, %v636
        %v640 = vld [vmem:[%s416] sm:$0xff]
        %v641 = vld [vmem:[#allocation11] sm:$0xff]
        %v642 = vld [vmem:[#allocation11 + $0x8] sm:$0xff]
        %v643 = vld [vmem:[#allocation11 + $0x10] sm:$0xff]
        %v644 = vld [vmem:[#allocation11 + $0x18] sm:$0xff]
        %v646 = vsel %vm486, %v640, 0
        %648 = vmatprep.subr.mxu0 0.0
        %649 = vmatpush1.msra.mxu0 %v641
        %650 = vmatprep.subr.mxu0 0.0
        %651 = vmatpush1.msra.mxu0 %v642
        %652 = vmatprep.subr.mxu0 0.0
        %653 = vmatpush1.msra.mxu0 %v643
        %654 = vmatprep.subr.mxu0 0.0
        %655 = vmatpush1.msra.mxu0 %v644
        %656 = vmatprep.subr.mxu0 0.0
        %657 = vmatpush1.msra.mxu0 0.0
        %658 = vmatprep.subr.mxu0 0.0
        %659 = vmatpush1.msra.mxu0 0.0
        %660 = vmatprep.subr.mxu0 0.0
        %661 = vmatpush1.msra.mxu0 0.0
        %662 = vmatprep.subr.mxu0 0.0
        %663 = vmatpush1.msra.mxu0 0.0
        %664 = vmatprep.subr.mxu0 0.0
        %665 = vmatpush1.msra.mxu0 0.0
        %666 = vmatprep.subr.mxu0 0.0
        %667 = vmatpush1.msra.mxu0 0.0
        %668 = vmatprep.subr.mxu0 0.0
        %669 = vmatpush1.msra.mxu0 0.0
        %670 = vmatprep.subr.mxu0 0.0
        %671 = vmatpush1.msra.mxu0 0.0
        %672 = vmatprep.subr.mxu0 0.0
        %673 = vmatpush1.msra.mxu0 0.0
        %674 = vmatprep.subr.mxu0 0.0
        %675 = vmatpush1.msra.mxu0 0.0
        %676 = vmatprep.subr.mxu0 0.0
        %677 = vmatpush1.msra.mxu0 0.0
        %678 = vmatprep.subr.mxu0 0.0
        %679 = vmatpush1.msra.mxu0 0.0
        %680 = vmatprep.subr.mxu0 0.0
        %681 = vmatpush1.msra.mxu0 0.0
        %682 = vmatprep.subr.mxu0 0.0
        %683 = vmatpush1.msra.mxu0 0.0
        %684 = vmatprep.subr.mxu0 0.0
        %685 = vmatpush1.msra.mxu0 0.0
        %686 = vmatprep.subr.mxu0 0.0
        %687 = vmatpush1.msra.mxu0 0.0
        %688 = vmatprep.subr.mxu0 0.0
        %689 = vmatpush1.msra.mxu0 0.0
        %690 = vmatprep.subr.mxu0 0.0
        %691 = vmatpush1.msra.mxu0 0.0
        %692 = vmatprep.subr.mxu0 0.0
        %693 = vmatpush1.msra.mxu0 0.0
        %694 = vmatprep.subr.mxu0 0.0
        %695 = vmatpush1.msra.mxu0 0.0
        %696 = vmatprep.subr.mxu0 0.0
        %697 = vmatpush1.msra.mxu0 0.0
        %698 = vmatprep.subr.mxu0 0.0
        %699 = vmatpush1.msra.mxu0 0.0
        %700 = vmatprep.subr.mxu0 0.0
        %701 = vmatpush1.msra.mxu0 0.0
        %702 = vmatprep.subr.mxu0 0.0
        %703 = vmatpush1.msra.mxu0 0.0
        %704 = vmatprep.subr.mxu0 0.0
        %705 = vmatpush1.msra.mxu0 0.0
        %706 = vmatprep.subr.mxu0 0.0
        %707 = vmatpush1.msra.mxu0 0.0
        %708 = vmatprep.subr.mxu0 0.0
        %709 = vmatpush1.msra.mxu0 0.0
        %710 = vmatprep.subr.mxu0 0.0
        %711 = vmatpush1.msra.mxu0 0.0
        %712 = vmatprep.mubr.f32.mxu0 0.0
        %713 = vmatmul.mubr.f32.gmra.mrb[0].mxu0 %v646
        %v714 = vpop.f32.mrb[0].mxu0
        %v715 = vadd.f32 0.0, %v714
        %v716 = vpop.f32.mrb[0].mxu0
        %717 = vdwg.mxu0
        %718 = vst.msk [vmem:[%s480] sm:$0xff] %vm486, %v715
        %s719 = sand.u32 %s203, 1
        %s720 = scalar_lea.sflag [#allocation4], %s719
        %s721 = sand.u32 %s203, 1
        %s722 = smul.addr %s721, 8
        %s723 = scalar_lea.vmem [#allocation13], %s722
        %s724 = sand.u32 %s34, 1
        %s725 = scalar_lea.sflag [#allocation15], %s724
        %s726 = sand.u32 %s231, 1
        %s727 = smul.addr %s726, 8
        %s728 = scalar_lea.vmem [#allocation14], %s727
        %s729 = sand.u32 %s34, 1
        %s730 = scalar_lea.sflag [#allocation15], %s729
        %s731 = sand.u32 %s259, 1
        %s732 = smul.addr %s731, 8
        %s733 = scalar_lea.vmem [#allocation16], %s732
        // Predicated region
        $region69: #{tpu_custom_call.1} parent=43 // pred_check
          %p734 = pneg %p213
        $region70: #{tpu_custom_call.1} parent=43 // pred_check_branch
          %736 = sbr.rel (%p734) target = $region72
        $region71: #{tpu_custom_call.1} parent=43 // pred_region
          %s738 = ssub.s32 128, 128
          %739 = vsyncadd %s720, %s738
          %s740 = sadd.s32 %s39, %s38
          %s741 = smul.addr %s740, 128
          %s742 = scalar_lea.hbm %s6, %s741
          %s744 = sshll.u32 %s723, 4
          %s745 = int_to_ptr.vmem [resolvable:$true] %s744
          %747 = dma.vmem_to_hbm [thread:$0]  %s745, 128, %s742, %s720
        $region72: #{tpu_custom_call.1} parent=43 // pred_fallthru
          _
        // Predicated region
        $region73: #{tpu_custom_call.1} parent=43 // pred_check
          %p748 = pneg %p241
        $region74: #{tpu_custom_call.1} parent=43 // pred_check_branch
          %750 = sbr.rel (%p748) target = $region76
        $region75: #{tpu_custom_call.1} parent=43 // pred_region
          %s752 = ssub.s32 128, 128
          %753 = vsyncadd %s725, %s752
          %s754 = sadd.s32 %s39, %s38
          %s755 = smul.addr %s754, 128
          %s756 = scalar_lea.hbm %s7, %s755
          %s758 = sshll.u32 %s728, 4
          %s759 = int_to_ptr.vmem [resolvable:$true] %s758
          %761 = dma.vmem_to_hbm [thread:$0]  %s759, 128, %s756, %s725
        $region76: #{tpu_custom_call.1} parent=43 // pred_fallthru
          _
        // Predicated region
        $region77: #{tpu_custom_call.1} parent=43 // pred_check
          %p762 = pneg %p269
        $region78: #{tpu_custom_call.1} parent=43 // pred_check_branch
          %764 = sbr.rel (%p762) target = $region80
        $region79: #{tpu_custom_call.1} parent=43 // pred_region
          %s766 = ssub.s32 128, 128
          %767 = vsyncadd %s730, %s766
          %s768 = sadd.s32 %s39, %s38
          %s769 = smul.addr %s768, 128
          %s770 = scalar_lea.hbm %s8, %s769
          %s772 = sshll.u32 %s733, 4
          %s773 = int_to_ptr.vmem [resolvable:$true] %s772
          %775 = dma.vmem_to_hbm [thread:$0]  %s773, 128, %s770, %s730
        $region80: #{tpu_custom_call.1} parent=43 // pred_fallthru
          _
      $region44: #{tpu_custom_call.1} parent=5 // pred_fallthru
        _
      %p776 = scmp.le.s32.totalorder 2, %s29
      // Predicated region
      $region81: #{tpu_custom_call.1} parent=5 // pred_check
        %p777 = pneg %p776
      $region82: #{tpu_custom_call.1} parent=5 // pred_check_branch
        %779 = sbr.rel (%p777) target = $region84
      $region83: #{tpu_custom_call.1} parent=5 // pred_region
        %s780 = ssub.s32 %s29, 2
        // Predicated region
        $region85: #{tpu_custom_call.1} parent=83 // pred_check
          %p781 = pneg %p219
        $region86: #{tpu_custom_call.1} parent=83 // pred_check_branch
          %783 = sbr.rel (%p781) target = $region88
        $region87: #{tpu_custom_call.1} parent=83 // pred_region
          %s784 = sand.u32 %s204, 1
          %s785 = scalar_lea.sflag [#allocation4], %s784
          %s786 = sand.u32 %s204, 1
          %s787 = smul.addr %s786, 8
          %s788 = scalar_lea.vmem [#allocation13], %s787
          %789 = dma.done %s785, 128
        $region88: #{tpu_custom_call.1} parent=83 // pred_fallthru
          _
        // Predicated region
        $region89: #{tpu_custom_call.1} parent=83 // pred_check
          %p790 = pneg %p247
        $region90: #{tpu_custom_call.1} parent=83 // pred_check_branch
          %792 = sbr.rel (%p790) target = $region92
        $region91: #{tpu_custom_call.1} parent=83 // pred_region
          %s793 = sand.u32 %s35, 1
          %s794 = scalar_lea.sflag [#allocation15], %s793
          %s795 = sand.u32 %s232, 1
          %s796 = smul.addr %s795, 8
          %s797 = scalar_lea.vmem [#allocation14], %s796
          %798 = dma.done %s794, 128
        $region92: #{tpu_custom_call.1} parent=83 // pred_fallthru
          _
        // Predicated region
        $region93: #{tpu_custom_call.1} parent=83 // pred_check
          %p799 = pneg %p275
        $region94: #{tpu_custom_call.1} parent=83 // pred_check_branch
          %801 = sbr.rel (%p799) target = $region96
        $region95: #{tpu_custom_call.1} parent=83 // pred_region
          %s802 = sand.u32 %s35, 1
          %s803 = scalar_lea.sflag [#allocation15], %s802
          %s804 = sand.u32 %s260, 1
          %s805 = smul.addr %s804, 8
          %s806 = scalar_lea.vmem [#allocation16], %s805
          %807 = dma.done %s803, 128
        $region96: #{tpu_custom_call.1} parent=83 // pred_fallthru
          _
      $region84: #{tpu_custom_call.1} parent=5 // pred_fallthru
        _
    $region6: #{tpu_custom_call.1} parent=1 // loop_footer
      %s33 = sadd.s32 1, %s29
    $region7: #{tpu_custom_call.1} parent=1 // loop_footer_branch
      %28 = sbr.rel target = $region3
    $region8: #{tpu_custom_call.1} parent=1 // loop_exit
      _
    %808 = vsyncpa [#allocation3], 1
    %s809 = scalar_lea.sflag [#allocation3], 1
    %810 = vsyncpa %s809, 1
    %811 = vsyncpa [#allocation6], 1
    %s812 = scalar_lea.sflag [#allocation6], 1
    %813 = vsyncpa %s812, 1
    %814 = vsyncpa [#allocation9], 1
    %815 = vsyncpa [#allocation12], 1
    %816 = vsyncpa [#allocation4], 1
    %s817 = scalar_lea.sflag [#allocation4], 1
    %818 = vsyncpa %s817, 1
    %819 = vsyncpa [#allocation15], 1
    %s820 = scalar_lea.sflag [#allocation15], 1
    %821 = vsyncpa %s820, 1

</llo_original>
